<compile_context>
chip_gen: v7x
topology: tpu7x:2x2x1
jax: 0.10.0
libtpu: 0.0.40
codegen_flags: <defaults>
</compile_context>

<pallas_src>
import jax
import jax.numpy as jnp
from jax.experimental import pallas as pl
from jax.experimental.pallas import tpu as pltpu

EPS = 1e-5
_MiB = 1024 * 1024


def _rmsnorm_kernel(x_ref, w_ref, o_ref):
    # x_ref: (ROW_TILE, H) tile, w_ref: (1, H) f32, o_ref: (ROW_TILE, H)
    x = x_ref[...].astype(jnp.float32)
    w = w_ref[...]                                        # already f32, broadcasts over rows
    inv_h = 1.0 / x_ref.shape[-1]                         # Python constant (no VPU divide)
    ms = jnp.sum(x * x, axis=-1, keepdims=True) * inv_h   # (ROW_TILE, 1), XLU reduce
    inv = jax.lax.rsqrt(ms + EPS)                         # EUP
    o_ref[...] = (x * inv * w).astype(o_ref.dtype)


def _round_up(n, m):
    return ((n + m - 1) // m) * m


def _sublane_multiple(dtype):
    itemsize = jnp.dtype(dtype).itemsize
    return {4: 8, 2: 16, 1: 32}.get(itemsize, 8)


def _vmem_capacity_bytes():
    """Physical VMEM per TensorCore; falls back to 128 MiB if the query fails."""
    try:
        info = pltpu.get_tpu_info()
        return int(info.vmem_capacity_bytes)
    except Exception:
        return 128 * _MiB


def _pick_tile_params(R, H, dtype):
    """Pick (row_tile, vmem_limit_bytes).

    row_tile is chosen so the per-step INPUT bytes (in x.dtype) hit the
    generation-specific target, while the total in-flight VMEM
    (2x in + 2x out double buffers + ~2x f32 intermediates) stays within
    ~75% of the scoped VMEM limit.  No artificial row cap beyond that.
    """
    itemsize = jnp.dtype(dtype).itemsize
    sublane = _sublane_multiple(dtype)
    vmem_phys = _vmem_capacity_bytes()

    if vmem_phys <= 96 * _MiB:
        # v7x-class: 64 MiB/TC VMEM, ~3.2 TB/s HBM -> bigger steps to amortize
        # the ~0.35 us per-step pipeline overhead; stay well under 64 MiB.
        target_in_bytes = 8 * _MiB
        vmem_limit = 48 * _MiB
    else:
        # v5e/v6e: ~4 MiB/step is already >=94% amortized; 64 MiB limit is
        # comfortable headroom on 128 MiB physical VMEM.
        target_in_bytes = 4 * _MiB
        vmem_limit = 64 * _MiB

    # Per-row VMEM cost counted against the budget:
    #   2x input (double buffer) + 2x output + ~2x f32 intermediates.
    per_row_vmem = H * (4 * itemsize + 2 * 4)
    budget = (3 * vmem_limit) // 4
    rt_vmem = max(1, budget // per_row_vmem)
    rt_target = max(1, target_in_bytes // (H * itemsize))

    rt = min(rt_vmem, rt_target)
    rt = max(sublane, (rt // sublane) * sublane)
    # Never use a tile (much) larger than the problem itself.
    rt = min(rt, _round_up(R, sublane))
    rt = max(rt, sublane)
    return rt, vmem_limit


def rmsnorm_pallas(x, weight, *, row_tile=None):
    """RMSNorm over the last axis of x using a Pallas TPU kernel.

    x: (..., H) array, weight: (H,) array.
    """
    orig_shape = x.shape
    H = orig_shape[-1]
    x2d = x.reshape(-1, H)
    R = x2d.shape[0]

    sublane = _sublane_multiple(x.dtype)
    rt_auto, vmem_limit = _pick_tile_params(R, H, x.dtype)
    if row_tile is None:
        rt = rt_auto
    else:
        assert row_tile % sublane == 0, (
            f"row_tile must be a multiple of {sublane} for dtype {x.dtype}")
        rt = row_tile

    # Pre-cast weight once (removes per-step O(H) VPU cast inside the kernel).
    w2d = weight.astype(jnp.float32).reshape(1, H)

    grid_rows = pl.cdiv(R, rt)  # partial last block handled by Pallas (no host pad)

    itemsize = jnp.dtype(x.dtype).itemsize
    cost = pl.CostEstimate(
        flops=3 * R * H,
        transcendentals=R,
        bytes_accessed=2 * R * H * itemsize + H * 4,
    )

    out = pl.pallas_call(
        _rmsnorm_kernel,
        out_shape=jax.ShapeDtypeStruct((R, H), x.dtype),
        grid_spec=pltpu.PrefetchScalarGridSpec(
            num_scalar_prefetch=0,
            grid=(grid_rows,),
            in_specs=[
                pl.BlockSpec((rt, H), lambda i: (i, 0)),
                pl.BlockSpec((1, H), lambda i: (0, 0)),
            ],
            out_specs=pl.BlockSpec((rt, H), lambda i: (i, 0)),
        ),
        compiler_params=pltpu.CompilerParams(
            dimension_semantics=("parallel",),
            vmem_limit_bytes=vmem_limit,
        ),
        cost_estimate=cost,
    )(x2d, w2d)

    return out.reshape(orig_shape)


def _ref_rmsnorm(x, weight):
    return x * jax.lax.rsqrt(jnp.mean(x * x, axis=-1, keepdims=True) + EPS) * weight


if __name__ == "__main__":
    key = jax.random.PRNGKey(0)
    batch, seq, hidden = 2, 8, 32
    x = jax.random.normal(key, (batch, seq, hidden), dtype=jnp.float32)

    # RMSNorm weight initializes to ones (deterministic, matches nn.RMSNorm default).
    weight = jnp.ones((hidden,), dtype=jnp.float32)

    y = rmsnorm_pallas(x, weight)
    jax.block_until_ready(y)
    ref = _ref_rmsnorm(x, weight)
    assert jnp.allclose(y, ref, atol=1e-5, rtol=1e-5), "mismatch vs reference"

    # Partial-last-block case (R % row_tile != 0) to pin down the documented
    # OOB-read / discarded-OOB-write behavior the kernel relies on.
    key2 = jax.random.PRNGKey(0)
    x2 = jax.random.normal(key2, (2, 9, hidden), dtype=jnp.float32)  # R = 18
    y2 = rmsnorm_pallas(x2, weight, row_tile=8)                      # grid = 3, last block partial
    jax.block_until_ready(y2)
    ref2 = _ref_rmsnorm(x2, weight)
    assert jnp.allclose(y2, ref2, atol=1e-5, rtol=1e-5), "mismatch on partial block"

    # TODO(synk): torch.compile wrapping has no Pallas analogue; only the wrapped
    # RMSNorm forward is implemented (compilation is handled by XLA/Mosaic).
    print("KERNEL_OK")
</pallas_src>

<mosaic_0001>
module attributes {stable_mosaic.version = 11 : i64} {
  func.func @_rmsnorm_kernel(%arg0: i32, %arg1: memref<16x32xf32, #tpu.memory_space<vmem>>, %arg2: memref<1x32xf32, #tpu.memory_space<vmem>>, %arg3: memref<16x32xf32, #tpu.memory_space<vmem>>) attributes {dimension_semantics = [#tpu.dimension_semantics<parallel>], iteration_bounds = array<i64: 1>, scalar_prefetch = 0 : i64, scratch_operands = 0 : i64, tpu.core_type = #tpu.core_type<tc>, window_params = [{transform_indices = @transform_0, window_bounds = array<i64: 16, 32>}, {pipeline_mode = #tpu.pipeline_mode<synchronous>, transform_indices = @transform_1, window_bounds = array<i64: 1, 32>}, {transform_indices = @transform_2, window_bounds = array<i64: 16, 32>}]} {
    %c0 = arith.constant 0 : index
    %c0_0 = arith.constant 0 : index
    %0 = vector.load %arg1[%c0, %c0_0] : memref<16x32xf32, #tpu.memory_space<vmem>>, vector<16x32xf32>
    %c0_1 = arith.constant 0 : index
    %c0_2 = arith.constant 0 : index
    %1 = vector.load %arg2[%c0_1, %c0_2] : memref<1x32xf32, #tpu.memory_space<vmem>>, vector<1x32xf32>
    %2 = arith.mulf %0, %0 : vector<16x32xf32>
    %cst = arith.constant dense<0.000000e+00> : vector<16xf32>
    %3 = vector.multi_reduction <add>, %2, %cst [1] : vector<16x32xf32> to vector<16xf32>
    %4 = vector.shape_cast %3 : vector<16xf32> to vector<16x1xf32>
    %cst_3 = arith.constant 3.125000e-02 : f32
    %5 = vector.broadcast %cst_3 : f32 to vector<16x1xf32>
    %6 = arith.mulf %4, %5 : vector<16x1xf32>
    %cst_4 = arith.constant 9.99999974E-6 : f32
    %7 = vector.broadcast %cst_4 : f32 to vector<16x1xf32>
    %8 = arith.addf %6, %7 : vector<16x1xf32>
    %9 = math.rsqrt %8 : vector<16x1xf32>
    %10 = vector.broadcast %9 : vector<16x1xf32> to vector<16x32xf32>
    %11 = arith.mulf %0, %10 : vector<16x32xf32>
    %12 = vector.broadcast %1 : vector<1x32xf32> to vector<16x32xf32>
    %13 = arith.mulf %11, %12 : vector<16x32xf32>
    %c0_5 = arith.constant 0 : index
    %c0_6 = arith.constant 0 : index
    %14 = vector.load %arg3[%c0_5, %c0_6] : memref<16x32xf32, #tpu.memory_space<vmem>>, vector<16x32xf32>
    tpu.vector_store %arg3[%c0_5, %c0_6], %13 {strides = array<i32>} : memref<16x32xf32, #tpu.memory_space<vmem>>, vector<16x32xf32>,
    return
  }
  func.func @transform_0(%arg0: i32) -> (i32, i32) {
    %c0_i32 = arith.constant 0 : i32
    %c0_i32_0 = arith.constant 0 : i32
    return %arg0, %c0_i32 : i32, i32
  }
  func.func @transform_1(%arg0: i32) -> (i32, i32) {
    %c0_i32 = arith.constant 0 : i32
    %c0_i32_0 = arith.constant 0 : i32
    %c0_i32_1 = arith.constant 0 : i32
    return %c0_i32, %c0_i32_0 : i32, i32
  }
  func.func @transform_2(%arg0: i32) -> (i32, i32) {
    %c0_i32 = arith.constant 0 : i32
    %c0_i32_0 = arith.constant 0 : i32
    return %arg0, %c0_i32 : i32, i32
  }
}

</mosaic_0001>

<llo_original>
// kernel: tpu_custom_call.1
$region0: #{tpu_custom_call.1}
  #allocation0 [shape = 'u32[]', space=smem, size = 0x4, offset = 0x4, fixed_abs, tag = 'smem constant byte address 0x4 - core index']
  #allocation1 [shape = 'u32[144,128]{1,0:T(1,128)}', space=vmem, size = 0x12000, scoped, tag = 'internal scratch']
  %s0 = inlined_call_operand.hbm [shape: f32[16,32], index: 0, kind: input, shape index: {}]
  %s1 = inlined_call_operand.hbm [shape: f32[1,32], index: 1, kind: input, shape index: {}]
  %s2 = inlined_call_operand.hbm [shape: f32[16,32], index: 2, kind: output, shape index: {}]
  %s3 = sld [smem:[#allocation0]]
  $region26: #{tpu_custom_call.1} parent=0
    _
  %s5 = ssub.s32 1, %s3
  %s6 = scalar_select 0, %s5, %s3
  $region1: #{tpu_custom_call.1} parent=0
    #allocation2 [shape = 'u8[8192]{0}', space=vmem, size = 0x2000, scoped, tag = 'input window, operand 0, single buffered']
    #allocation3 [shape = 's32[1]{0}', space=sflag, size = 0x4, scoped, tag = 'scoped memory for tpu_custom_call.1']
    #allocation4 [shape = 's32[1]{0}', space=sflag, size = 0x4, scoped, tag = 'scoped memory for tpu_custom_call.1']
    #allocation5 [shape = 'u8[512]{0}', space=vmem, size = 0x400, scoped, tag = 'input window, operand 1, single buffered']
    #allocation6 [shape = 's32[1]{0}', space=sflag, size = 0x4, scoped, tag = 'scoped memory for tpu_custom_call.1']
    #allocation7 [shape = 'u8[8192]{0}', space=vmem, size = 0x2000, scoped, tag = 'output window, operand 0, single buffered']
    %7 = vsyncpa [#allocation3], 0
    %8 = vsyncpa [#allocation6], 0
    %9 = vsyncpa [#allocation4], 0
    // Predicated region
    $region2: #{tpu_custom_call.1} parent=1 // pred_check
      _
    $region3: #{tpu_custom_call.1} parent=1 // pred_check_branch
      %11 = sbr.rel (0) target = $region5
    $region4: #{tpu_custom_call.1} parent=1 // pred_region
      %s13 = ssub.s32 256, 256
      %14 = vsyncadd [#allocation3], %s13
      %s15 = sshll.u32 [#allocation2], 4
      %s16 = int_to_ptr.vmem [resolvable:$true] %s15
      %21 = dma.hbm_to_vmem [thread:$0]  %s0, 256, %s16, [#allocation3], 128, 128, 8
    $region5: #{tpu_custom_call.1} parent=1 // pred_fallthru
      _
    // Predicated region
    $region6: #{tpu_custom_call.1} parent=1 // pred_check
      _
    $region7: #{tpu_custom_call.1} parent=1 // pred_check_branch
      %23 = sbr.rel (0) target = $region9
    $region8: #{tpu_custom_call.1} parent=1 // pred_region
      %s25 = ssub.s32 16, 16
      %26 = vsyncadd [#allocation6], %s25
      %s28 = sshll.u32 [#allocation5], 4
      %s29 = int_to_ptr.vmem [resolvable:$true] %s28
      %31 = dma.hbm_to_vmem [thread:$0]  %s1, 16, %s29, [#allocation6]
    $region9: #{tpu_custom_call.1} parent=1 // pred_fallthru
      _
    // Predicated region
    $region10: #{tpu_custom_call.1} parent=1 // pred_check
      _
    $region11: #{tpu_custom_call.1} parent=1 // pred_check_branch
      %33 = sbr.rel (0) target = $region13
    $region12: #{tpu_custom_call.1} parent=1 // pred_region
      %34 = dma.done [#allocation3], 256
    $region13: #{tpu_custom_call.1} parent=1 // pred_fallthru
      _
    // Predicated region
    $region14: #{tpu_custom_call.1} parent=1 // pred_check
      _
    $region15: #{tpu_custom_call.1} parent=1 // pred_check_branch
      %36 = sbr.rel (0) target = $region17
    $region16: #{tpu_custom_call.1} parent=1 // pred_region
      %37 = dma.done [#allocation6], 16
    $region17: #{tpu_custom_call.1} parent=1 // pred_fallthru
      _
    %v38 = vld [vmem:[#allocation2] sm:$0xff]
    %v39 = vld [vmem:[#allocation2 + $0x8] sm:$0xff]
    %v40 = vld [vmem:[#allocation5] sm:$0x1]
    %v41 = vmul.f32 %v38, %v38
    %v42 = vmul.f32 %v39, %v39
    %vm43 = vcmask 261120
    %v44 = vsel %vm43, %v41, 0.0
    %45 = vadd.xlane.f32.xlu0 %v44
    %v46 = vpop.xlane.xlu0 %45
    %v47 = vsel %vm43, %v42, 0.0
    %48 = vadd.xlane.f32.xlu0 %v47
    %v49 = vpop.xlane.xlu0 %48
    %v50 = vmul.f32 %v46, 0.03125
    %v51 = vmul.f32 %v49, 0.03125
    %v52 = vadd.f32 %v50, 1e-05
    %v53 = vadd.f32 %v51, 1e-05
    %v54 = vrsqrt.pop %v52
    %v55 = vrsqrt.pop %v53
    %v56 = vmul.f32 %v38, %v54
    %v57 = vmul.f32 %v39, %v55
    %v59 = vlaneseq
    %v60 = vshrl.u32 %v59, 7
    %v61 = vsub.s32 0, %v60
    %v62 = vrot.slane %v40, %v61
    %v64 = vmul.f32 %v56, %v62
    %v65 = vmul.f32 %v57, %v62
    %66 = vst.msk [vmem:[#allocation7] sm:$0xff] %vm43, %v64
    %67 = vst.msk [vmem:[#allocation7 + $0x8] sm:$0xff] %vm43, %v65
    // Predicated region
    $region18: #{tpu_custom_call.1} parent=1 // pred_check
      _
    $region19: #{tpu_custom_call.1} parent=1 // pred_check_branch
      %69 = sbr.rel (0) target = $region21
    $region20: #{tpu_custom_call.1} parent=1 // pred_region
      %s71 = ssub.s32 256, 256
      %72 = vsyncadd [#allocation4], %s71
      %s73 = sshll.u32 [#allocation7], 4
      %s74 = int_to_ptr.vmem [resolvable:$true] %s73
      %79 = dma.vmem_to_hbm [thread:$0]  %s74, 256, %s2, [#allocation4], 128, 128, 8
    $region21: #{tpu_custom_call.1} parent=1 // pred_fallthru
      _
    // Predicated region
    $region22: #{tpu_custom_call.1} parent=1 // pred_check
      _
    $region23: #{tpu_custom_call.1} parent=1 // pred_check_branch
      %81 = sbr.rel (0) target = $region25
    $region24: #{tpu_custom_call.1} parent=1 // pred_region
      %82 = dma.done [#allocation4], 256
    $region25: #{tpu_custom_call.1} parent=1 // pred_fallthru
      _
    %83 = vsyncpa [#allocation3], 1
    %84 = vsyncpa [#allocation6], 1
    %85 = vsyncpa [#allocation4], 1

</llo_original>
